<compile_context>
chip_gen: v5e
topology: v5e:2x2
jax: 0.10.0
libtpu: 0.0.40
codegen_flags: <defaults>
</compile_context>

<pallas_src>
import functools

import jax
import jax.numpy as jnp
from jax.experimental import pallas as pl
from jax.experimental.pallas import tpu as pltpu


def _end2end_kernel(x_ref, num_ref, boxes_ref, scores_ref, classes_ref, *,
                    n_total, tile_n, multi_block, need_mask):
    # x_ref:       (1, tn, 6)  natural-layout input block (contiguous HBM slab)
    # num_ref:     (1, 1, 1)   int32 (resident accumulator only if multi_block)
    # boxes_ref:   (1, tn, 4)  natural layout (pure slice-copy of x)
    # scores_ref:  (1, tn, 1)
    # classes_ref: (1, tn, 1)  int32

    # Boxes: straight copy of the first 4 channels, same layout as the input.
    boxes_ref[...] = x_ref[:, :, 0:4]

    scores = x_ref[:, :, 4:5]                      # (1, tn, 1)
    scores_ref[...] = scores

    cls = x_ref[:, :, 5:6]                         # (1, tn, 1) float
    pos = scores > 0.0

    if need_mask:
        # Ragged last tile: mask rows beyond N for the count, and zero the
        # class source so no garbage floats go through the int convert.
        n_idx = pl.program_id(1)
        row = n_idx * tile_n + jax.lax.broadcasted_iota(jnp.int32, pos.shape, 1)
        valid = row < n_total
        pos = jnp.logical_and(pos, valid)
        cls = jnp.where(valid, cls, 0.0)

    # torch .int() truncates toward zero; float->int32 convert matches
    # (NaN/Inf/>=2^31 undefined, same caveat as torch).
    classes_ref[...] = cls.astype(jnp.int32)

    tile_count = jnp.sum(pos.astype(jnp.int32), axis=1, keepdims=True)  # (1,1,1)

    if multi_block:
        n_idx = pl.program_id(1)

        @pl.when(n_idx == 0)
        def _():
            num_ref[...] = jnp.zeros_like(num_ref)

        num_ref[...] += tile_count
    else:
        # Full-N block: single whole-block reduce written once.
        num_ref[...] = tile_count


def end2end(x, *, tile_n=4096):
    """x: (B, N, C>=6) float array. Returns (num_dets, boxes, scores, classes)."""
    B, N, C = x.shape
    assert C >= 6, "last dim must hold [4 box coords, score, class]"

    if C > 6:
        # TODO(synk): have the upstream head emit exactly 6 channels so this
        # slice (an extra XLA copy pass when unfused) disappears; the kernel's
        # block last-dim must equal the full extent, so it cannot read a
        # 6-of-C window directly.
        x = x[:, :, :6]

    # Full-N block whenever it fits; otherwise tile N (tile must be 8-aligned).
    tn = N if N <= tile_n else tile_n
    if tn != N:
        assert tn % 8 == 0, "tile_n must be a multiple of 8 when tiling N"
    n_blocks = pl.cdiv(N, tn)
    multi_block = n_blocks > 1
    need_mask = (N % tn) != 0
    grid = (B, n_blocks)

    itemsize = jnp.dtype(x.dtype).itemsize
    cost = pl.CostEstimate(
        flops=B * N,                               # compares + adds (rough)
        transcendentals=0,
        bytes_accessed=(B * N * 6 * itemsize       # input
                        + B * N * 4 * itemsize     # boxes
                        + B * N * itemsize         # scores
                        + B * N * 4                # classes (int32)
                        + B * 4),                  # num_dets
    )

    kernel = functools.partial(_end2end_kernel, n_total=N, tile_n=tn,
                               multi_block=multi_block, need_mask=need_mask)

    num_dets, boxes, scores, classes = pl.pallas_call(
        kernel,
        out_shape=(
            jax.ShapeDtypeStruct((B, 1, 1), jnp.int32),   # num_dets
            jax.ShapeDtypeStruct((B, N, 4), x.dtype),     # boxes (final layout)
            jax.ShapeDtypeStruct((B, N, 1), x.dtype),     # scores
            jax.ShapeDtypeStruct((B, N, 1), jnp.int32),   # classes
        ),
        grid=grid,
        in_specs=[pl.BlockSpec((1, tn, 6), lambda b, n: (b, n, 0))],
        out_specs=(
            pl.BlockSpec((1, 1, 1), lambda b, n: (b, 0, 0)),    # (resident)
            pl.BlockSpec((1, tn, 4), lambda b, n: (b, n, 0)),
            pl.BlockSpec((1, tn, 1), lambda b, n: (b, n, 0)),
            pl.BlockSpec((1, tn, 1), lambda b, n: (b, n, 0)),
        ),
        compiler_params=pltpu.CompilerParams(
            dimension_semantics=("parallel", "arbitrary"),
            vmem_limit_bytes=48 * 1024 * 1024),
        cost_estimate=cost,
    )(x)

    # Only free metadata reshapes remain (drop trailing unit dims).
    num_dets = num_dets.reshape(B, 1)
    det_scores = scores.reshape(B, N)
    det_classes = classes.reshape(B, N)
    return num_dets, boxes, det_scores, det_classes


def end2end_ref(x):
    """Pure-JAX reference mirroring the PyTorch forward."""
    det_boxes = x[:, :, :4]
    det_scores = x[:, :, 4]
    det_classes = x[:, :, 5].astype(jnp.int32)
    num_dets = jnp.sum((x[:, :, 4] > 0.0).astype(jnp.int32),
                       axis=1, keepdims=True)
    return num_dets, det_boxes, det_scores, det_classes


def _make_input(key, B, N):
    k_box, k_score, k_cls = jax.random.split(key, 3)
    boxes = jax.random.uniform(k_box, (B, N, 4), jnp.float32) * 16.0
    scores = jax.random.normal(k_score, (B, N, 1), jnp.float32)   # mixed +/-
    classes = jax.random.randint(k_cls, (B, N, 1), 0, 10).astype(jnp.float32)
    return jnp.concatenate([boxes, scores, classes], axis=-1)     # (B, N, 6)


def _check(x, **kw):
    outs = end2end(x, **kw)
    jax.block_until_ready(outs)
    num_dets, det_boxes, det_scores, det_classes = outs
    r_num, r_boxes, r_scores, r_classes = end2end_ref(x)
    assert num_dets.dtype == jnp.int32 and det_classes.dtype == jnp.int32
    assert (num_dets == r_num).all()
    assert jnp.allclose(det_boxes, r_boxes)
    assert jnp.allclose(det_scores, r_scores)
    assert (det_classes == r_classes).all()


if __name__ == "__main__":
    key = jax.random.PRNGKey(0)
    k0, k1 = jax.random.split(key)

    # Primary small demo: batch=2, 8 candidates, 6 features (full-N path).
    _check(_make_input(k0, 2, 8))

    # N not a multiple of 8, single full-N block (exercises padded block).
    x2 = _make_input(k1, 2, 1300)
    _check(x2)

    # Forced multi-tile + ragged tail (exercises the resident num_dets
    # accumulator and the iota/class masks).
    _check(x2, tile_n=512)

    print("KERNEL_OK")
</pallas_src>

<mosaic_0001>
module attributes {stable_mosaic.version = 11 : i64} {
  func.func @_end2end_kernel(%arg0: i32, %arg1: i32, %arg2: memref<1x8x6xf32, #tpu.memory_space<vmem>>, %arg3: memref<1x1x1xi32, #tpu.memory_space<vmem>>, %arg4: memref<1x8x4xf32, #tpu.memory_space<vmem>>, %arg5: memref<1x8x1xf32, #tpu.memory_space<vmem>>, %arg6: memref<1x8x1xi32, #tpu.memory_space<vmem>>) attributes {dimension_semantics = [#tpu.dimension_semantics<parallel>, #tpu.dimension_semantics<arbitrary>], iteration_bounds = array<i64: 2, 1>, scalar_prefetch = 0 : i64, scratch_operands = 0 : i64, tpu.core_type = #tpu.core_type<tc>, window_params = [{transform_indices = @transform_0, window_bounds = array<i64: 1, 8, 6>}, {transform_indices = @transform_1, window_bounds = array<i64: 1, 1, 1>}, {transform_indices = @transform_2, window_bounds = array<i64: 1, 8, 4>}, {transform_indices = @transform_3, window_bounds = array<i64: 1, 8, 1>}, {transform_indices = @transform_4, window_bounds = array<i64: 1, 8, 1>}]} {
    %c0 = arith.constant 0 : index
    %c0_0 = arith.constant 0 : index
    %c0_1 = arith.constant 0 : index
    %0 = vector.load %arg2[%c0, %c0_0, %c0_1] : memref<1x8x6xf32, #tpu.memory_space<vmem>>, vector<1x8x4xf32>
    %c0_2 = arith.constant 0 : index
    %c0_3 = arith.constant 0 : index
    %c0_4 = arith.constant 0 : index
    %1 = vector.load %arg4[%c0_2, %c0_3, %c0_4] : memref<1x8x4xf32, #tpu.memory_space<vmem>>, vector<1x8x4xf32>
    tpu.vector_store %arg4[%c0_2, %c0_3, %c0_4], %0 {strides = array<i32>} : memref<1x8x4xf32, #tpu.memory_space<vmem>>, vector<1x8x4xf32>,
    %c0_5 = arith.constant 0 : index
    %c0_6 = arith.constant 0 : index
    %c4 = arith.constant 4 : index
    %2 = vector.load %arg2[%c0_5, %c0_6, %c4] : memref<1x8x6xf32, #tpu.memory_space<vmem>>, vector<1x8x1xf32>
    %c0_7 = arith.constant 0 : index
    %c0_8 = arith.constant 0 : index
    %c0_9 = arith.constant 0 : index
    %3 = vector.load %arg5[%c0_7, %c0_8, %c0_9] : memref<1x8x1xf32, #tpu.memory_space<vmem>>, vector<1x8x1xf32>
    tpu.vector_store %arg5[%c0_7, %c0_8, %c0_9], %2 {strides = array<i32>} : memref<1x8x1xf32, #tpu.memory_space<vmem>>, vector<1x8x1xf32>,
    %c0_10 = arith.constant 0 : index
    %c0_11 = arith.constant 0 : index
    %c5 = arith.constant 5 : index
    %4 = vector.load %arg2[%c0_10, %c0_11, %c5] : memref<1x8x6xf32, #tpu.memory_space<vmem>>, vector<1x8x1xf32>
    %cst = arith.constant 0.000000e+00 : f32
    %5 = vector.broadcast %cst : f32 to vector<1x8x1xf32>
    %6 = arith.cmpf ogt, %2, %5 : vector<1x8x1xf32>
    %7 = arith.fptosi %4 : vector<1x8x1xf32> to vector<1x8x1xi32>
    %c0_12 = arith.constant 0 : index
    %c0_13 = arith.constant 0 : index
    %c0_14 = arith.constant 0 : index
    %8 = vector.load %arg6[%c0_12, %c0_13, %c0_14] : memref<1x8x1xi32, #tpu.memory_space<vmem>>, vector<1x8x1xi32>
    tpu.vector_store %arg6[%c0_12, %c0_13, %c0_14], %7 {strides = array<i32>} : memref<1x8x1xi32, #tpu.memory_space<vmem>>, vector<1x8x1xi32>,
    %9 = arith.extui %6 : vector<1x8x1xi1> to vector<1x8x1xi32>
    %cst_15 = arith.constant dense<0> : vector<1x1xi32>
    %10 = vector.multi_reduction <add>, %9, %cst_15 [1] : vector<1x8x1xi32> to vector<1x1xi32>
    %11 = vector.shape_cast %10 : vector<1x1xi32> to vector<1x1x1xi32>
    %c0_16 = arith.constant 0 : index
    %c0_17 = arith.constant 0 : index
    %c0_18 = arith.constant 0 : index
    %12 = vector.load %arg3[%c0_16, %c0_17, %c0_18] : memref<1x1x1xi32, #tpu.memory_space<vmem>>, vector<1x1x1xi32>
    tpu.vector_store %arg3[%c0_16, %c0_17, %c0_18], %11 {strides = array<i32>} : memref<1x1x1xi32, #tpu.memory_space<vmem>>, vector<1x1x1xi32>,
    return
  }
  func.func @transform_0(%arg0: i32, %arg1: i32) -> (i32, i32, i32) {
    %c0_i32 = arith.constant 0 : i32
    %c0_i32_0 = arith.constant 0 : i32
    return %arg0, %arg1, %c0_i32 : i32, i32, i32
  }
  func.func @transform_1(%arg0: i32, %arg1: i32) -> (i32, i32, i32) {
    %c0_i32 = arith.constant 0 : i32
    %c0_i32_0 = arith.constant 0 : i32
    %c0_i32_1 = arith.constant 0 : i32
    return %arg0, %c0_i32, %c0_i32_0 : i32, i32, i32
  }
  func.func @transform_2(%arg0: i32, %arg1: i32) -> (i32, i32, i32) {
    %c0_i32 = arith.constant 0 : i32
    %c0_i32_0 = arith.constant 0 : i32
    return %arg0, %arg1, %c0_i32 : i32, i32, i32
  }
  func.func @transform_3(%arg0: i32, %arg1: i32) -> (i32, i32, i32) {
    %c0_i32 = arith.constant 0 : i32
    %c0_i32_0 = arith.constant 0 : i32
    return %arg0, %arg1, %c0_i32 : i32, i32, i32
  }
  func.func @transform_4(%arg0: i32, %arg1: i32) -> (i32, i32, i32) {
    %c0_i32 = arith.constant 0 : i32
    %c0_i32_0 = arith.constant 0 : i32
    return %arg0, %arg1, %c0_i32 : i32, i32, i32
  }
}

</mosaic_0001>

<llo_original>
// kernel: tpu_custom_call.1
$region0: #{tpu_custom_call.1}
  #allocation0 [shape = 'u32[]', space=smem, size = 0x4, offset = 0x4, fixed_abs, tag = 'smem constant byte address 0x4 - core index']
  #allocation1 [shape = 'u32[72,128]{1,0:T(1,128)}', space=vmem, size = 0x9000, scoped, tag = 'internal scratch']
  %s0 = inlined_call_operand.vmem [shape: f32[2,8,6], index: 0, kind: input, shape index: {}]
  %s1 = inlined_call_operand.vmem [shape: s32[2,1,1], index: 1, kind: output, shape index: {0}]
  %s2 = inlined_call_operand.vmem [shape: f32[2,8,4], index: 2, kind: output, shape index: {1}]
  %s3 = inlined_call_operand.vmem [shape: f32[2,8,1], index: 3, kind: output, shape index: {2}]
  %s4 = inlined_call_operand.vmem [shape: s32[2,8,1], index: 4, kind: output, shape index: {3}]
  %5 = xla_tuple %s1, %s2, %s3, %s4
  %s6 = sld [smem:[#allocation0]]
  $region61: #{tpu_custom_call.1} parent=0
    _
  %s8 = ssub.s32 1, %s6
  %s9 = scalar_select 0, %s8, %s6
  loop: start=0, step=1, limit=4
  $region2: #{tpu_custom_call.1} parent=0 // loop_pre_header
    _
  $region3: #{tpu_custom_call.1} parent=0 // loop_header
    %s11 = sphi 0, %s15
    %p12 = scmp.ge.s32.totalorder %s11, 4
    %s18 = sphi 0, %s30
    %s19 = sphi 0, %s26
    %s20 = sphi 0, %s18
    %s21 = sphi 0, %s19
    %s22 = sphi 0, %s20
    %s23 = sphi 0, %s21
    %s35 = sphi 0, %s37
    %s38 = sphi 0, %s35
    %s39 = sphi 0, %s38
    %s55 = sphi 0, %s39
    %s61 = sphi 0, %s63
    %s64 = sphi 0, %s61
    %s65 = sphi 0, %s64
    %s81 = sphi 0, %s65
    %s89 = sphi 0, %s91
    %s92 = sphi 0, %s89
    %s93 = sphi 0, %s92
    %s109 = sphi 0, %s93
    %s117 = sphi 0, %s119
    %s120 = sphi 0, %s117
    %s121 = sphi 0, %s120
    %s137 = sphi 0, %s121
    %s145 = sphi 0, %s147
    %s148 = sphi 0, %s145
    %s149 = sphi 0, %s148
    %s165 = sphi 0, %s149
  $region4: #{tpu_custom_call.1} parent=0 // loop_header_branch
    %14 = sbr.rel (%p12) target = $region8
  $region5: #{tpu_custom_call.1} parent=0 // loop_body
    %s16 = ssub.s32 %s11, 1
    %s17 = ssub.s32 %s11, 2
    %s24 = sadd.s32 1, %s19
    %p25 = scmp.ge.s32.totalorder %s24, 1
    %s26 = scalar_select %p25, 0, %s24
    %s27 = sadd.s32 1, %s18
    %s28 = scalar_select %p25, %s27, %s18
    %p29 = scmp.ge.s32.totalorder %s28, 2
    %s30 = scalar_select %p29, 0, %s28
    %s31 = ssub.s32 %s18, %s30
    %s32 = ssub.s32 %s19, %s26
    %s33 = sor.u32 %s31, %s32
    %p34 = scmp.eq.s32.totalorder %s33, 0
    %s36 = sadd.s32 %s35, 1
    %s37 = scalar_select %p34, %s35, %s36
    %p40 = pneg %p34
    %p41 = scmp.eq.s32.totalorder %s11, 1
    %p42 = por %p40, %p41
    %p43 = scmp.ne.s32.totalorder %s35, %s38
    %p44 = scmp.eq.s32.totalorder %s11, 0
    %p45 = por %p43, %p44
    %p46 = scmp.ne.s32.totalorder %s35, %s38
    %p47 = scmp.eq.s32.totalorder %s16, 1
    %p48 = por %p46, %p47
    %p49 = scmp.ne.s32.totalorder %s38, %s39
    %p50 = scmp.eq.s32.totalorder %s16, 0
    %p51 = por %p49, %p50
    %p52 = scmp.ne.s32.totalorder %s38, %s39
    %p53 = scmp.eq.s32.totalorder %s17, 1
    %p54 = por %p52, %p53
    %p56 = scmp.ne.s32.totalorder %s39, %s55
    %p57 = scmp.eq.s32.totalorder %s17, 0
    %p58 = por %p56, %p57
    %s59 = ssub.s32 %s18, %s30
    %p60 = scmp.eq.s32.totalorder %s59, 0
    %s62 = sadd.s32 %s61, 1
    %s63 = scalar_select %p60, %s61, %s62
    %p66 = pneg %p60
    %p67 = scmp.eq.s32.totalorder %s11, 1
    %p68 = por %p66, %p67
    %p69 = scmp.ne.s32.totalorder %s61, %s64
    %p70 = scmp.eq.s32.totalorder %s11, 0
    %p71 = por %p69, %p70
    %p72 = scmp.ne.s32.totalorder %s61, %s64
    %p73 = scmp.eq.s32.totalorder %s16, 1
    %p74 = por %p72, %p73
    %p75 = scmp.ne.s32.totalorder %s64, %s65
    %p76 = scmp.eq.s32.totalorder %s16, 0
    %p77 = por %p75, %p76
    %p78 = scmp.ne.s32.totalorder %s64, %s65
    %p79 = scmp.eq.s32.totalorder %s17, 1
    %p80 = por %p78, %p79
    %p82 = scmp.ne.s32.totalorder %s65, %s81
    %p83 = scmp.eq.s32.totalorder %s17, 0
    %p84 = por %p82, %p83
    %s85 = ssub.s32 %s18, %s30
    %s86 = ssub.s32 %s19, %s26
    %s87 = sor.u32 %s85, %s86
    %p88 = scmp.eq.s32.totalorder %s87, 0
    %s90 = sadd.s32 %s89, 1
    %s91 = scalar_select %p88, %s89, %s90
    %p94 = pneg %p88
    %p95 = scmp.eq.s32.totalorder %s11, 1
    %p96 = por %p94, %p95
    %p97 = scmp.ne.s32.totalorder %s89, %s92
    %p98 = scmp.eq.s32.totalorder %s11, 0
    %p99 = por %p97, %p98
    %p100 = scmp.ne.s32.totalorder %s89, %s92
    %p101 = scmp.eq.s32.totalorder %s16, 1
    %p102 = por %p100, %p101
    %p103 = scmp.ne.s32.totalorder %s92, %s93
    %p104 = scmp.eq.s32.totalorder %s16, 0
    %p105 = por %p103, %p104
    %p106 = scmp.ne.s32.totalorder %s92, %s93
    %p107 = scmp.eq.s32.totalorder %s17, 1
    %p108 = por %p106, %p107
    %p110 = scmp.ne.s32.totalorder %s93, %s109
    %p111 = scmp.eq.s32.totalorder %s17, 0
    %p112 = por %p110, %p111
    %s113 = ssub.s32 %s18, %s30
    %s114 = ssub.s32 %s19, %s26
    %s115 = sor.u32 %s113, %s114
    %p116 = scmp.eq.s32.totalorder %s115, 0
    %s118 = sadd.s32 %s117, 1
    %s119 = scalar_select %p116, %s117, %s118
    %p122 = pneg %p116
    %p123 = scmp.eq.s32.totalorder %s11, 1
    %p124 = por %p122, %p123
    %p125 = scmp.ne.s32.totalorder %s117, %s120
    %p126 = scmp.eq.s32.totalorder %s11, 0
    %p127 = por %p125, %p126
    %p128 = scmp.ne.s32.totalorder %s117, %s120
    %p129 = scmp.eq.s32.totalorder %s16, 1
    %p130 = por %p128, %p129
    %p131 = scmp.ne.s32.totalorder %s120, %s121
    %p132 = scmp.eq.s32.totalorder %s16, 0
    %p133 = por %p131, %p132
    %p134 = scmp.ne.s32.totalorder %s120, %s121
    %p135 = scmp.eq.s32.totalorder %s17, 1
    %p136 = por %p134, %p135
    %p138 = scmp.ne.s32.totalorder %s121, %s137
    %p139 = scmp.eq.s32.totalorder %s17, 0
    %p140 = por %p138, %p139
    %s141 = ssub.s32 %s18, %s30
    %s142 = ssub.s32 %s19, %s26
    %s143 = sor.u32 %s141, %s142
    %p144 = scmp.eq.s32.totalorder %s143, 0
    %s146 = sadd.s32 %s145, 1
    %s147 = scalar_select %p144, %s145, %s146
    %p150 = pneg %p144
    %p151 = scmp.eq.s32.totalorder %s11, 1
    %p152 = por %p150, %p151
    %p153 = scmp.ne.s32.totalorder %s145, %s148
    %p154 = scmp.eq.s32.totalorder %s11, 0
    %p155 = por %p153, %p154
    %p156 = scmp.ne.s32.totalorder %s145, %s148
    %p157 = scmp.eq.s32.totalorder %s16, 1
    %p158 = por %p156, %p157
    %p159 = scmp.ne.s32.totalorder %s148, %s149
    %p160 = scmp.eq.s32.totalorder %s16, 0
    %p161 = por %p159, %p160
    %p162 = scmp.ne.s32.totalorder %s148, %s149
    %p163 = scmp.eq.s32.totalorder %s17, 1
    %p164 = por %p162, %p163
    %p166 = scmp.ne.s32.totalorder %s149, %s165
    %p167 = scmp.eq.s32.totalorder %s17, 0
    %p168 = por %p166, %p167
    %p169 = scmp.le.s32.totalorder 1, %s11
    %p170 = scmp.lt.s32.totalorder %s11, 3
    %p171 = pnand %p169, %p170
    %p172 = pneg %p171
    // Predicated region
    $region9: #{tpu_custom_call.1} parent=5 // pred_check
      _
    $region10: #{tpu_custom_call.1} parent=5 // pred_check_branch
      %174 = sbr.rel (%p171) target = $region12
    $region11: #{tpu_custom_call.1} parent=5 // pred_region
      %s175 = ssub.s32 %s11, 1
    $region12: #{tpu_custom_call.1} parent=5 // pred_fallthru
      _
    %p176 = scmp.lt.s32.totalorder %s11, 2
    // Predicated region
    $region13: #{tpu_custom_call.1} parent=5 // pred_check
      %p177 = pneg %p176
    $region14: #{tpu_custom_call.1} parent=5 // pred_check_branch
      %179 = sbr.rel (%p177) target = $region16
    $region15: #{tpu_custom_call.1} parent=5 // pred_region
      // Predicated region
      $region17: #{tpu_custom_call.1} parent=15 // pred_check
        %p180 = pneg %p45
      $region18: #{tpu_custom_call.1} parent=15 // pred_check_branch
        %182 = sbr.rel (%p180) target = $region20
      $region19: #{tpu_custom_call.1} parent=15 // pred_region
        %p183 = scmp.lt.s32.totalorder %s18, 1
        %s184 = scalar_select %p183, %s18, 1
        %p185 = scmp.lt.s32.totalorder %s19, 0
        %s186 = scalar_select %p185, %s19, 0
        %s187 = sadd.s32 %s186, %s184
        %s188 = smul.addr %s187, 8
        %s189 = scalar_lea.vmem %s0, %s188
      $region20: #{tpu_custom_call.1} parent=15 // pred_fallthru
        _
    $region16: #{tpu_custom_call.1} parent=5 // pred_fallthru
      _
    %p190 = scmp.le.s32.totalorder 1, %s11
    %p191 = scmp.lt.s32.totalorder %s11, 3
    %p192 = pnand %p190, %p191
    %p193 = pneg %p192
    // Predicated region
    $region21: #{tpu_custom_call.1} parent=5 // pred_check
      _
    $region22: #{tpu_custom_call.1} parent=5 // pred_check_branch
      %195 = sbr.rel (%p192) target = $region24
    $region23: #{tpu_custom_call.1} parent=5 // pred_region
      %s196 = ssub.s32 %s11, 1
      %p197 = scmp.lt.s32.totalorder %s20, 1
      %s198 = scalar_select %p197, %s20, 1
      %p199 = scmp.lt.s32.totalorder %s21, 0
      %s200 = scalar_select %p199, %s21, 0
      %s201 = sadd.s32 %s200, %s198
      %s202 = smul.addr %s201, 8
      %s203 = scalar_lea.vmem %s0, %s202
      %p204 = pneg %p51
      %p205 = pneg %p48
      %p206 = pneg %p77
      %p207 = pneg %p74
      %p208 = scmp.lt.s32.totalorder %s20, 1
      %s209 = scalar_select %p208, %s20, 1
      %s210 = scalar_lea.vmem %s1, %s209
      %p211 = pneg %p105
      %p212 = pneg %p102
      %p213 = scmp.lt.s32.totalorder %s20, 1
      %s214 = scalar_select %p213, %s20, 1
      %p215 = scmp.lt.s32.totalorder %s21, 0
      %s216 = scalar_select %p215, %s21, 0
      %s217 = sadd.s32 %s216, %s214
      %s218 = smul.addr %s217, 8
      %s219 = scalar_lea.vmem %s2, %s218
      %p220 = pneg %p133
      %p221 = pneg %p130
      %p222 = scmp.lt.s32.totalorder %s20, 1
      %s223 = scalar_select %p222, %s20, 1
      %p224 = scmp.lt.s32.totalorder %s21, 0
      %s225 = scalar_select %p224, %s21, 0
      %s226 = sadd.s32 %s225, %s223
      %s227 = smul.addr %s226, 8
      %s228 = scalar_lea.vmem %s3, %s227
      %p229 = pneg %p161
      %p230 = pneg %p158
      %p231 = scmp.lt.s32.totalorder %s20, 1
      %s232 = scalar_select %p231, %s20, 1
      %p233 = scmp.lt.s32.totalorder %s21, 0
      %s234 = scalar_select %p233, %s21, 0
      %s235 = sadd.s32 %s234, %s232
      %s236 = smul.addr %s235, 8
      %s237 = scalar_lea.vmem %s4, %s236
      %p238 = scmp.lt.s32.totalorder %s20, 1
      %s239 = scalar_select %p238, %s20, 1
      %p240 = scmp.lt.s32.totalorder %s21, 0
      %s241 = scalar_select %p240, %s21, 0
      %s242 = sadd.s32 %s241, %s239
      %s243 = smul.addr %s242, 8
      %s244 = scalar_lea.vmem %s0, %s243
      %p245 = scmp.lt.s32.totalorder %s20, 1
      %s246 = scalar_select %p245, %s20, 1
      %s247 = scalar_lea.vmem %s1, %s246
      %p248 = scmp.lt.s32.totalorder %s20, 1
      %s249 = scalar_select %p248, %s20, 1
      %p250 = scmp.lt.s32.totalorder %s21, 0
      %s251 = scalar_select %p250, %s21, 0
      %s252 = sadd.s32 %s251, %s249
      %s253 = smul.addr %s252, 8
      %s254 = scalar_lea.vmem %s2, %s253
      %p255 = scmp.lt.s32.totalorder %s20, 1
      %s256 = scalar_select %p255, %s20, 1
      %p257 = scmp.lt.s32.totalorder %s21, 0
      %s258 = scalar_select %p257, %s21, 0
      %s259 = sadd.s32 %s258, %s256
      %s260 = smul.addr %s259, 8
      %s261 = scalar_lea.vmem %s3, %s260
      %p262 = scmp.lt.s32.totalorder %s20, 1
      %s263 = scalar_select %p262, %s20, 1
      %p264 = scmp.lt.s32.totalorder %s21, 0
      %s265 = scalar_select %p264, %s21, 0
      %s266 = sadd.s32 %s265, %s263
      %s267 = smul.addr %s266, 8
      %s268 = scalar_lea.vmem %s4, %s267
      %v269 = vld [vmem:[%s244] sm:$0xff]
      %vm270 = vcmask 31744
      %271 = vst.msk [vmem:[%s254] sm:$0xff] %vm270, %v269
      %v272 = vld [vmem:[%s244] sm:$0xff]
      %274 = vrot.lane.b32.xlu0 %v272, 124
      %v275 = vpop.permute.xlu0 %274
      %vm277 = vcmask 7168
      %278 = vst.msk [vmem:[%s261] sm:$0xff] %vm277, %v275
      %v279 = vld [vmem:[%s244] sm:$0xff]
      %vm280 = vcmp.gt.f32.partialorder %v272, 0.0
      %v281 = vcvt.f32.s32.to.zero.pseudo %v279
      %282 = vrot.lane.b32.xlu0 %v281, 123
      %v283 = vpop.permute.xlu0 %282
      %284 = vst.msk [vmem:[%s268] sm:$0xff] %vm277, %v283
      %v285 = vsel %vm280, 1, 0
      %vm286 = vcmask 39968
      %v287 = vsel %vm286, %v285, 0
      %v288 = vrot.slane %v287, 4
      %v289 = vadd.s32 %v287, %v288
      %v290 = vrot.slane %v289, 2
      %v291 = vadd.s32 %v289, %v290
      %v292 = vrot.slane %v291, 1
      %v293 = vadd.s32 %v291, %v292
      %294 = vrot.lane.b32.xlu0 %v293, 124
      %v295 = vpop.permute.xlu0 %294
      %vm296 = vcmask 0
      %297 = vst.msk [vmem:[%s247] sm:$0x1] %vm296, %v295
      %p298 = scmp.lt.s32.totalorder %s20, 1
      %s299 = scalar_select %p298, %s20, 1
      %s300 = scalar_lea.vmem %s1, %s299
      %p301 = scmp.lt.s32.totalorder %s20, 1
      %s302 = scalar_select %p301, %s20, 1
      %p303 = scmp.lt.s32.totalorder %s21, 0
      %s304 = scalar_select %p303, %s21, 0
      %s305 = sadd.s32 %s304, %s302
      %s306 = smul.addr %s305, 8
      %s307 = scalar_lea.vmem %s2, %s306
      %p308 = scmp.lt.s32.totalorder %s20, 1
      %s309 = scalar_select %p308, %s20, 1
      %p310 = scmp.lt.s32.totalorder %s21, 0
      %s311 = scalar_select %p310, %s21, 0
      %s312 = sadd.s32 %s311, %s309
      %s313 = smul.addr %s312, 8
      %s314 = scalar_lea.vmem %s3, %s313
      %p315 = scmp.lt.s32.totalorder %s20, 1
      %s316 = scalar_select %p315, %s20, 1
      %p317 = scmp.lt.s32.totalorder %s21, 0
      %s318 = scalar_select %p317, %s21, 0
      %s319 = sadd.s32 %s318, %s316
      %s320 = smul.addr %s319, 8
      %s321 = scalar_lea.vmem %s4, %s320
      // Predicated region
      $region25: #{tpu_custom_call.1} parent=23 // pred_check
        %p322 = pneg %p74
      $region26: #{tpu_custom_call.1} parent=23 // pred_check_branch
        %324 = sbr.rel (%p322) target = $region28
      $region27: #{tpu_custom_call.1} parent=23 // pred_region
        _
      $region28: #{tpu_custom_call.1} parent=23 // pred_fallthru
        _
      // Predicated region
      $region29: #{tpu_custom_call.1} parent=23 // pred_check
        %p325 = pneg %p102
      $region30: #{tpu_custom_call.1} parent=23 // pred_check_branch
        %327 = sbr.rel (%p325) target = $region32
      $region31: #{tpu_custom_call.1} parent=23 // pred_region
        _
      $region32: #{tpu_custom_call.1} parent=23 // pred_fallthru
        _
      // Predicated region
      $region33: #{tpu_custom_call.1} parent=23 // pred_check
        %p328 = pneg %p130
      $region34: #{tpu_custom_call.1} parent=23 // pred_check_branch
        %330 = sbr.rel (%p328) target = $region36
      $region35: #{tpu_custom_call.1} parent=23 // pred_region
        _
      $region36: #{tpu_custom_call.1} parent=23 // pred_fallthru
        _
      // Predicated region
      $region37: #{tpu_custom_call.1} parent=23 // pred_check
        %p331 = pneg %p158
      $region38: #{tpu_custom_call.1} parent=23 // pred_check_branch
        %333 = sbr.rel (%p331) target = $region40
      $region39: #{tpu_custom_call.1} parent=23 // pred_region
        _
      $region40: #{tpu_custom_call.1} parent=23 // pred_fallthru
        _
    $region24: #{tpu_custom_call.1} parent=5 // pred_fallthru
      _
    %p334 = scmp.le.s32.totalorder 2, %s11
    // Predicated region
    $region41: #{tpu_custom_call.1} parent=5 // pred_check
      %p335 = pneg %p334
    $region42: #{tpu_custom_call.1} parent=5 // pred_check_branch
      %337 = sbr.rel (%p335) target = $region44
    $region43: #{tpu_custom_call.1} parent=5 // pred_region
      %s338 = ssub.s32 %s11, 2
      // Predicated region
      $region45: #{tpu_custom_call.1} parent=43 // pred_check
        %p339 = pneg %p80
      $region46: #{tpu_custom_call.1} parent=43 // pred_check_branch
        %341 = sbr.rel (%p339) target = $region48
      $region47: #{tpu_custom_call.1} parent=43 // pred_region
        %p342 = scmp.lt.s32.totalorder %s22, 1
        %s343 = scalar_select %p342, %s22, 1
        %s344 = scalar_lea.vmem %s1, %s343
      $region48: #{tpu_custom_call.1} parent=43 // pred_fallthru
        _
      // Predicated region
      $region49: #{tpu_custom_call.1} parent=43 // pred_check
        %p345 = pneg %p108
      $region50: #{tpu_custom_call.1} parent=43 // pred_check_branch
        %347 = sbr.rel (%p345) target = $region52
      $region51: #{tpu_custom_call.1} parent=43 // pred_region
        %p348 = scmp.lt.s32.totalorder %s22, 1
        %s349 = scalar_select %p348, %s22, 1
        %p350 = scmp.lt.s32.totalorder %s23, 0
        %s351 = scalar_select %p350, %s23, 0
        %s352 = sadd.s32 %s351, %s349
        %s353 = smul.addr %s352, 8
        %s354 = scalar_lea.vmem %s2, %s353
      $region52: #{tpu_custom_call.1} parent=43 // pred_fallthru
        _
      // Predicated region
      $region53: #{tpu_custom_call.1} parent=43 // pred_check
        %p355 = pneg %p136
      $region54: #{tpu_custom_call.1} parent=43 // pred_check_branch
        %357 = sbr.rel (%p355) target = $region56
      $region55: #{tpu_custom_call.1} parent=43 // pred_region
        %p358 = scmp.lt.s32.totalorder %s22, 1
        %s359 = scalar_select %p358, %s22, 1
        %p360 = scmp.lt.s32.totalorder %s23, 0
        %s361 = scalar_select %p360, %s23, 0
        %s362 = sadd.s32 %s361, %s359
        %s363 = smul.addr %s362, 8
        %s364 = scalar_lea.vmem %s3, %s363
      $region56: #{tpu_custom_call.1} parent=43 // pred_fallthru
        _
      // Predicated region
      $region57: #{tpu_custom_call.1} parent=43 // pred_check
        %p365 = pneg %p164
      $region58: #{tpu_custom_call.1} parent=43 // pred_check_branch
        %367 = sbr.rel (%p365) target = $region60
      $region59: #{tpu_custom_call.1} parent=43 // pred_region
        %p368 = scmp.lt.s32.totalorder %s22, 1
        %s369 = scalar_select %p368, %s22, 1
        %p370 = scmp.lt.s32.totalorder %s23, 0
        %s371 = scalar_select %p370, %s23, 0
        %s372 = sadd.s32 %s371, %s369
        %s373 = smul.addr %s372, 8
        %s374 = scalar_lea.vmem %s4, %s373
      $region60: #{tpu_custom_call.1} parent=43 // pred_fallthru
        _
    $region44: #{tpu_custom_call.1} parent=5 // pred_fallthru
      _
  $region6: #{tpu_custom_call.1} parent=0 // loop_footer
    %s15 = sadd.s32 1, %s11
  $region7: #{tpu_custom_call.1} parent=0 // loop_footer_branch
    %10 = sbr.rel target = $region3
  $region8: #{tpu_custom_call.1} parent=0 // loop_exit
    _

</llo_original>
